<compile_context>
chip_gen: v5e
topology: v5e:2x2
jax: 0.10.0
libtpu: 0.0.40
codegen_flags: <defaults>
</compile_context>

<pallas_src>
import math

import jax
import jax.numpy as jnp
from jax.experimental import pallas as pl
from jax.experimental.pallas import tpu as pltpu


def _leaky_relu(x, negative_slope=0.01):
    # PyTorch nn.LeakyReLU default negative_slope = 0.01.
    # max(x, a*x) == leaky_relu(x) for 0 < a < 1; one VALU op vs cmp+select.
    return jnp.maximum(x, negative_slope * x)


def _round_up(n, m):
    return ((n + m - 1) // m) * m


def discriminator_kernel(x_ref, w1_ref, b1_ref, w2_ref, b2_ref, w3_ref, b3_ref,
                         o_ref):
    """One batch tile, transposed layout.

    x_ref : (2, Bt)    input features (batch on lanes)
    w1    : (H, 2), b1: (H, 1)
    w2    : (H, H), b2: (H, 1)
    w3    : (H, 1), b3: (1, 1)
    o_ref : (1, Bt)
    H = padded hidden size (25 -> 32); padded rows/cols are zero.
    Padded batch columns (beyond the real B) just compute sigmoid(bias-only)
    garbage and are sliced off in the wrapper — never reduce over the batch
    axis inside this kernel.
    """
    x0 = x_ref[0:1, :]                      # (1, Bt)
    x1 = x_ref[1:2, :]                      # (1, Bt)

    # Layer 1: K=2 contraction as two VPU broadcast multiply-adds (no MXU trip).
    h = w1_ref[:, 0:1] * x0 + w1_ref[:, 1:2] * x1 + b1_ref[...]   # (H, Bt)
    h = _leaky_relu(h)

    # Layer 2: (H, H) @ (H, Bt) on the MXU — N dimension is the lane-dense batch.
    h = jnp.dot(w2_ref[...], h, preferred_element_type=jnp.float32) + b2_ref[...]
    h = _leaky_relu(h)

    # Layer 3: single output row -> elementwise mul + sublane reduction (XLU),
    # avoids a 1-row MXU matmul.
    logit = jnp.sum(w3_ref[...] * h, axis=0, keepdims=True) + b3_ref[...]  # (1, Bt)

    o_ref[...] = jax.nn.sigmoid(logit).astype(o_ref.dtype)


def _choose_bt(B, block_b):
    """Batch tile: multiple of 128 lanes, large enough to amortize grid-step
    overhead, capped at 8192 (VALU saturates long before VMEM), and capped so
    the grid keeps >= 2 tiles when B allows it (feeds both TCs on v7x)."""
    target = min(_round_up(max(block_b, 128), 128), 8192)
    half = _round_up(pl.cdiv(B, 2), 128)          # >= 128, multiple of 128
    return min(target, half)


def discriminator_forward(x, params, *, block_b=8192):
    """x: (B, 2) float32 -> (B, 1) float32 in [0, 1]."""
    w1, b1, w2, b2, w3, b3 = params
    B = x.shape[0]

    bt = _choose_bt(B, block_b)
    b_pad = _round_up(B, bt)
    num_tiles = b_pad // bt

    # Layout plumbing: transpose the tiny (B, 2) first, then pad only the last
    # (lane) axis -> XLA emits a single fused pad, no padded+transposed HBM
    # round trip.  Padded columns are sliced off below.
    xt = jnp.pad(x.astype(jnp.float32).T, ((0, 0), (0, b_pad - B)))  # (2, b_pad)

    def resident(shape):
        # Weights/biases: same block every grid step -> stay VMEM-resident.
        return pl.BlockSpec(shape, lambda i: tuple(0 for _ in shape))

    out_t = pl.pallas_call(
        discriminator_kernel,
        out_shape=jax.ShapeDtypeStruct((1, b_pad), jnp.float32),
        grid=(num_tiles,),
        in_specs=[
            pl.BlockSpec((2, bt), lambda i: (0, i)),     # x tile (pipelined)
            resident(w1.shape), resident(b1.shape),
            resident(w2.shape), resident(b2.shape),
            resident(w3.shape), resident(b3.shape),
        ],
        out_specs=pl.BlockSpec((1, bt), lambda i: (0, i)),
        compiler_params=pltpu.CompilerParams(
            dimension_semantics=("parallel",)),          # shard tiles across TCs (v7x)
    )(xt, w1, b1, w2, b2, w3, b3)

    # (1, B_pad) row-major == (B_pad, 1) flattened -> cheap contiguous slice +
    # free reshape back to the module's (B, 1) output shape.
    return out_t[0, :B].reshape(B, 1)


def init_params(key, n_hn=25, n_hn_pad=32):
    """PyTorch nn.Linear default init U(-1/sqrt(fan_in), 1/sqrt(fan_in)),
    stored in the transposed/padded kernel layout (out, in), hidden padded to
    n_hn_pad with zeros (numerically identical)."""
    ks = jax.random.split(key, 6)

    def linear(kw, kb, fan_in, fan_out):
        bound = 1.0 / math.sqrt(fan_in)
        w = jax.random.uniform(kw, (fan_out, fan_in), jnp.float32,
                               minval=-bound, maxval=bound)
        b = jax.random.uniform(kb, (fan_out,), jnp.float32,
                               minval=-bound, maxval=bound)
        return w, b

    w1, b1 = linear(ks[0], ks[1], 2, n_hn)        # (25, 2), (25,)
    w2, b2 = linear(ks[2], ks[3], n_hn, n_hn)     # (25, 25), (25,)
    w3, b3 = linear(ks[4], ks[5], n_hn, 1)        # (1, 25), (1,)

    H = n_hn_pad
    w1p = jnp.zeros((H, 2), jnp.float32).at[:n_hn, :].set(w1)
    b1p = jnp.zeros((H, 1), jnp.float32).at[:n_hn, 0].set(b1)
    w2p = jnp.zeros((H, H), jnp.float32).at[:n_hn, :n_hn].set(w2)
    b2p = jnp.zeros((H, 1), jnp.float32).at[:n_hn, 0].set(b2)
    w3p = jnp.zeros((H, 1), jnp.float32).at[:n_hn, 0].set(w3[0])
    b3p = b3.reshape(1, 1)
    return (w1p, b1p, w2p, b2p, w3p, b3p)


def reference_forward(x, params, n_hn=25):
    """Plain-JAX reference on the logical (unpadded) weights."""
    w1, b1, w2, b2, w3, b3 = params
    h = jnp.maximum(x @ w1[:n_hn, :].T + b1[:n_hn, 0], 0.01 * (x @ w1[:n_hn, :].T + b1[:n_hn, 0]))
    h2 = h @ w2[:n_hn, :n_hn].T + b2[:n_hn, 0]
    h2 = jnp.maximum(h2, 0.01 * h2)
    return jax.nn.sigmoid(h2 @ w3[:n_hn, :] + b3[0])


if __name__ == "__main__":
    key = jax.random.PRNGKey(0)
    k_x, k_p = jax.random.split(key)

    n_hn = 25
    params = init_params(k_p, n_hn=n_hn)

    # Cases exercise: single-tile padded batch (B=8), 2-tile split for the
    # v7x "parallel" axis (B=300, default block_b), and a non-128-multiple
    # block_b (300 -> hardened to 384) with a 3-tile grid (B=1000).
    for B, block_b in ((8, 8192), (300, 8192), (1000, 300)):
        x = jax.random.normal(jax.random.fold_in(k_x, B), (B, 2), jnp.float32)
        out = jax.block_until_ready(
            discriminator_forward(x, params, block_b=block_b))
        ref = reference_forward(x, params, n_hn=n_hn)
        assert out.shape == (B, 1), out.shape
        assert jnp.allclose(out, ref, atol=1e-5, rtol=1e-5), (out, ref)

    print("KERNEL_OK")
</pallas_src>

<mosaic_0001>
module attributes {stable_mosaic.version = 11 : i64} {
  func.func @discriminator_kernel(%arg0: i32, %arg1: memref<2x128xf32, #tpu.memory_space<vmem>>, %arg2: memref<32x2xf32, #tpu.memory_space<vmem>>, %arg3: memref<32x1xf32, #tpu.memory_space<vmem>>, %arg4: memref<32x32xf32, #tpu.memory_space<vmem>>, %arg5: memref<32x1xf32, #tpu.memory_space<vmem>>, %arg6: memref<32x1xf32, #tpu.memory_space<vmem>>, %arg7: memref<1x1xf32, #tpu.memory_space<vmem>>, %arg8: memref<1x128xf32, #tpu.memory_space<vmem>>) attributes {dimension_semantics = [#tpu.dimension_semantics<parallel>], iteration_bounds = array<i64: 1>, scalar_prefetch = 0 : i64, scratch_operands = 0 : i64, tpu.core_type = #tpu.core_type<tc>, window_params = [{transform_indices = @transform_0, window_bounds = array<i64: 2, 128>}, {pipeline_mode = #tpu.pipeline_mode<synchronous>, transform_indices = @transform_1, window_bounds = array<i64: 32, 2>}, {pipeline_mode = #tpu.pipeline_mode<synchronous>, transform_indices = @transform_2, window_bounds = array<i64: 32, 1>}, {pipeline_mode = #tpu.pipeline_mode<synchronous>, transform_indices = @transform_3, window_bounds = array<i64: 32, 32>}, {pipeline_mode = #tpu.pipeline_mode<synchronous>, transform_indices = @transform_4, window_bounds = array<i64: 32, 1>}, {pipeline_mode = #tpu.pipeline_mode<synchronous>, transform_indices = @transform_5, window_bounds = array<i64: 32, 1>}, {pipeline_mode = #tpu.pipeline_mode<synchronous>, transform_indices = @transform_6, window_bounds = array<i64: 1, 1>}, {transform_indices = @transform_7, window_bounds = array<i64: 1, 128>}]} {
    %c0 = arith.constant 0 : index
    %c0_0 = arith.constant 0 : index
    %0 = vector.load %arg1[%c0, %c0_0] : memref<2x128xf32, #tpu.memory_space<vmem>>, vector<1x128xf32>
    %c1 = arith.constant 1 : index
    %c0_1 = arith.constant 0 : index
    %1 = vector.load %arg1[%c1, %c0_1] : memref<2x128xf32, #tpu.memory_space<vmem>>, vector<1x128xf32>
    %c0_2 = arith.constant 0 : index
    %c0_3 = arith.constant 0 : index
    %2 = vector.load %arg2[%c0_2, %c0_3] : memref<32x2xf32, #tpu.memory_space<vmem>>, vector<32x1xf32>
    %3 = vector.broadcast %2 : vector<32x1xf32> to vector<32x128xf32>
    %4 = vector.broadcast %0 : vector<1x128xf32> to vector<32x128xf32>
    %5 = arith.mulf %3, %4 : vector<32x128xf32>
    %c0_4 = arith.constant 0 : index
    %c1_5 = arith.constant 1 : index
    %6 = vector.load %arg2[%c0_4, %c1_5] : memref<32x2xf32, #tpu.memory_space<vmem>>, vector<32x1xf32>
    %7 = vector.broadcast %6 : vector<32x1xf32> to vector<32x128xf32>
    %8 = vector.broadcast %1 : vector<1x128xf32> to vector<32x128xf32>
    %9 = arith.mulf %7, %8 : vector<32x128xf32>
    %10 = arith.addf %5, %9 : vector<32x128xf32>
    %c0_6 = arith.constant 0 : index
    %c0_7 = arith.constant 0 : index
    %11 = vector.load %arg3[%c0_6, %c0_7] : memref<32x1xf32, #tpu.memory_space<vmem>>, vector<32x1xf32>
    %12 = vector.broadcast %11 : vector<32x1xf32> to vector<32x128xf32>
    %13 = arith.addf %10, %12 : vector<32x128xf32>
    %cst = arith.constant 0.00999999977 : f32
    %14 = vector.broadcast %cst : f32 to vector<32x128xf32>
    %15 = arith.mulf %14, %13 : vector<32x128xf32>
    %16 = arith.maximumf %13, %15 : vector<32x128xf32>
    %c0_8 = arith.constant 0 : index
    %c0_9 = arith.constant 0 : index
    %17 = vector.load %arg4[%c0_8, %c0_9] : memref<32x32xf32, #tpu.memory_space<vmem>>, vector<32x32xf32>
    %cst_10 = arith.constant dense<0.000000e+00> : vector<32x128xf32>
    %18 = tpu.matmul %17, %16, %cst_10 {dimension_numbers = #tpu.dot_dimension_numbers<[1], [0], [0], [1], [0, 0, 1, 1], [], []>} : vector<32x32xf32>, vector<32x128xf32>, vector<32x128xf32> -> vector<32x128xf32>
    %c0_11 = arith.constant 0 : index
    %c0_12 = arith.constant 0 : index
    %19 = vector.load %arg5[%c0_11, %c0_12] : memref<32x1xf32, #tpu.memory_space<vmem>>, vector<32x1xf32>
    %20 = vector.broadcast %19 : vector<32x1xf32> to vector<32x128xf32>
    %21 = arith.addf %18, %20 : vector<32x128xf32>
    %cst_13 = arith.constant 0.00999999977 : f32
    %22 = vector.broadcast %cst_13 : f32 to vector<32x128xf32>
    %23 = arith.mulf %22, %21 : vector<32x128xf32>
    %24 = arith.maximumf %21, %23 : vector<32x128xf32>
    %c0_14 = arith.constant 0 : index
    %c0_15 = arith.constant 0 : index
    %25 = vector.load %arg6[%c0_14, %c0_15] : memref<32x1xf32, #tpu.memory_space<vmem>>, vector<32x1xf32>
    %26 = vector.broadcast %25 : vector<32x1xf32> to vector<32x128xf32>
    %27 = arith.mulf %26, %24 : vector<32x128xf32>
    %cst_16 = arith.constant dense<0.000000e+00> : vector<128xf32>
    %28 = vector.multi_reduction <add>, %27, %cst_16 [0] : vector<32x128xf32> to vector<128xf32>
    %29 = vector.shape_cast %28 : vector<128xf32> to vector<1x128xf32>
    %c0_17 = arith.constant 0 : index
    %c0_18 = arith.constant 0 : index
    %30 = vector.load %arg7[%c0_17, %c0_18] : memref<1x1xf32, #tpu.memory_space<vmem>>, vector<1x1xf32>
    %31 = vector.broadcast %30 : vector<1x1xf32> to vector<1x128xf32>
    %32 = arith.addf %29, %31 : vector<1x128xf32>
    %33 = arith.negf %32 : vector<1x128xf32>
    %34 = math.exp %33 : vector<1x128xf32>
    %cst_19 = arith.constant 1.000000e+00 : f32
    %35 = vector.broadcast %cst_19 : f32 to vector<1x128xf32>
    %36 = arith.addf %35, %34 : vector<1x128xf32>
    %37 = arith.divf %35, %36 : vector<1x128xf32>
    %c0_20 = arith.constant 0 : index
    %c0_21 = arith.constant 0 : index
    %38 = vector.load %arg8[%c0_20, %c0_21] : memref<1x128xf32, #tpu.memory_space<vmem>>, vector<1x128xf32>
    tpu.vector_store %arg8[%c0_20, %c0_21], %37 {strides = array<i32>} : memref<1x128xf32, #tpu.memory_space<vmem>>, vector<1x128xf32>,
    return
  }
  func.func @transform_0(%arg0: i32) -> (i32, i32) {
    %c0_i32 = arith.constant 0 : i32
    %c0_i32_0 = arith.constant 0 : i32
    return %c0_i32, %arg0 : i32, i32
  }
  func.func @transform_1(%arg0: i32) -> (i32, i32) {
    %c0_i32 = arith.constant 0 : i32
    %c0_i32_0 = arith.constant 0 : i32
    %c0_i32_1 = arith.constant 0 : i32
    return %c0_i32, %c0_i32_0 : i32, i32
  }
  func.func @transform_2(%arg0: i32) -> (i32, i32) {
    %c0_i32 = arith.constant 0 : i32
    %c0_i32_0 = arith.constant 0 : i32
    %c0_i32_1 = arith.constant 0 : i32
    return %c0_i32, %c0_i32_0 : i32, i32
  }
  func.func @transform_3(%arg0: i32) -> (i32, i32) {
    %c0_i32 = arith.constant 0 : i32
    %c0_i32_0 = arith.constant 0 : i32
    %c0_i32_1 = arith.constant 0 : i32
    return %c0_i32, %c0_i32_0 : i32, i32
  }
  func.func @transform_4(%arg0: i32) -> (i32, i32) {
    %c0_i32 = arith.constant 0 : i32
    %c0_i32_0 = arith.constant 0 : i32
    %c0_i32_1 = arith.constant 0 : i32
    return %c0_i32, %c0_i32_0 : i32, i32
  }
  func.func @transform_5(%arg0: i32) -> (i32, i32) {
    %c0_i32 = arith.constant 0 : i32
    %c0_i32_0 = arith.constant 0 : i32
    %c0_i32_1 = arith.constant 0 : i32
    return %c0_i32, %c0_i32_0 : i32, i32
  }
  func.func @transform_6(%arg0: i32) -> (i32, i32) {
    %c0_i32 = arith.constant 0 : i32
    %c0_i32_0 = arith.constant 0 : i32
    %c0_i32_1 = arith.constant 0 : i32
    return %c0_i32, %c0_i32_0 : i32, i32
  }
  func.func @transform_7(%arg0: i32) -> (i32, i32) {
    %c0_i32 = arith.constant 0 : i32
    %c0_i32_0 = arith.constant 0 : i32
    return %c0_i32, %arg0 : i32, i32
  }
}

</mosaic_0001>

<llo_original>
// kernel: tpu_custom_call.1
$region0: #{tpu_custom_call.1}
  #allocation0 [shape = 'u32[]', space=smem, size = 0x4, offset = 0x4, fixed_abs, tag = 'smem constant byte address 0x4 - core index']
  #allocation1 [shape = 'u32[72,128]{1,0:T(1,128)}', space=vmem, size = 0x9000, scoped, tag = 'internal scratch']
  #allocation2 [shape = 'f32[1,1]{1,0:T(1,128)S(1)}', space=vmem, size = 0x200, scoped, tag = 'scoped memory for tpu_custom_call.1']
  %s0 = inlined_call_operand.vmem [shape: f32[2,128], index: 0, kind: input, shape index: {}]
  %s1 = inlined_call_operand.vmem [shape: f32[32,2], index: 1, kind: input, shape index: {}]
  %s2 = inlined_call_operand.vmem [shape: f32[32,1], index: 2, kind: input, shape index: {}]
  %s3 = inlined_call_operand.vmem [shape: f32[32,32], index: 3, kind: input, shape index: {}]
  %s4 = inlined_call_operand.vmem [shape: f32[32,1], index: 4, kind: input, shape index: {}]
  %s5 = inlined_call_operand.vmem [shape: f32[32,1], index: 5, kind: input, shape index: {}]
  %s6 = inlined_call_operand.<no memory space> [shape: f32[1,1], index: 6, kind: input, shape index: {}]
  %s7 = inlined_call_operand.hbm [shape: f32[1,128], index: 7, kind: output, shape index: {}]
  %s8 = sld [smem:[#allocation0]]
  $region38: #{tpu_custom_call.1} parent=0
    _
  %s10 = ssub.s32 1, %s8
  %s11 = scalar_select 0, %s10, %s8
  %v12 = vstv %s6
  %13 = vst [vmem:[#allocation2] sm:$0x1] %v12
  $region1: #{tpu_custom_call.1} parent=0
    #allocation3 [shape = 'u8[512]{0}', space=vmem, size = 0x400, scoped, tag = 'output window, operand 0, single buffered']
    #allocation4 [shape = 's32[1]{0}', space=sflag, size = 0x4, scoped, tag = 'scoped memory for tpu_custom_call.1']
    %14 = vsyncpa [#allocation4], 0
    // Predicated region
    $region2: #{tpu_custom_call.1} parent=1 // pred_check
      _
    $region3: #{tpu_custom_call.1} parent=1 // pred_check_branch
      %16 = sbr.rel (0) target = $region5
    $region4: #{tpu_custom_call.1} parent=1 // pred_region
      _
    $region5: #{tpu_custom_call.1} parent=1 // pred_fallthru
      _
    // Predicated region
    $region6: #{tpu_custom_call.1} parent=1 // pred_check
      _
    $region7: #{tpu_custom_call.1} parent=1 // pred_check_branch
      %18 = sbr.rel (0) target = $region9
    $region8: #{tpu_custom_call.1} parent=1 // pred_region
      _
    $region9: #{tpu_custom_call.1} parent=1 // pred_fallthru
      _
    // Predicated region
    $region10: #{tpu_custom_call.1} parent=1 // pred_check
      _
    $region11: #{tpu_custom_call.1} parent=1 // pred_check_branch
      %20 = sbr.rel (0) target = $region13
    $region12: #{tpu_custom_call.1} parent=1 // pred_region
      _
    $region13: #{tpu_custom_call.1} parent=1 // pred_fallthru
      _
    // Predicated region
    $region14: #{tpu_custom_call.1} parent=1 // pred_check
      _
    $region15: #{tpu_custom_call.1} parent=1 // pred_check_branch
      %22 = sbr.rel (0) target = $region17
    $region16: #{tpu_custom_call.1} parent=1 // pred_region
      _
    $region17: #{tpu_custom_call.1} parent=1 // pred_fallthru
      _
    // Predicated region
    $region18: #{tpu_custom_call.1} parent=1 // pred_check
      _
    $region19: #{tpu_custom_call.1} parent=1 // pred_check_branch
      %24 = sbr.rel (0) target = $region21
    $region20: #{tpu_custom_call.1} parent=1 // pred_region
      _
    $region21: #{tpu_custom_call.1} parent=1 // pred_fallthru
      _
    // Predicated region
    $region22: #{tpu_custom_call.1} parent=1 // pred_check
      _
    $region23: #{tpu_custom_call.1} parent=1 // pred_check_branch
      %26 = sbr.rel (0) target = $region25
    $region24: #{tpu_custom_call.1} parent=1 // pred_region
      _
    $region25: #{tpu_custom_call.1} parent=1 // pred_fallthru
      _
    // Predicated region
    $region26: #{tpu_custom_call.1} parent=1 // pred_check
      _
    $region27: #{tpu_custom_call.1} parent=1 // pred_check_branch
      %28 = sbr.rel (0) target = $region29
    $region28: #{tpu_custom_call.1} parent=1 // pred_region
      _
    $region29: #{tpu_custom_call.1} parent=1 // pred_fallthru
      _
    %v29 = vld [vmem:[%s0] sm:$0x1]
    %v30 = vld [vmem:[%s0 + $0x1] sm:$0x1]
    %v31 = vld [vmem:[%s1] sm:$0xff]
    %v32 = vld [vmem:[%s1 + $0x8] sm:$0xff]
    %v33 = vld [vmem:[%s1 + $0x10] sm:$0xff]
    %v34 = vld [vmem:[%s1 + $0x18] sm:$0xff]
    %36 = vset.pattern.permute.xlu0 0
    %37 = vperm.xlu0 %36, %v31
    %v38 = vpop.permute.xlu0 %37
    %41 = vset.pattern.permute.xlu0 0
    %42 = vperm.xlu0 %41, %v32
    %v43 = vpop.permute.xlu0 %42
    %46 = vset.pattern.permute.xlu0 0
    %47 = vperm.xlu0 %46, %v33
    %v48 = vpop.permute.xlu0 %47
    %51 = vset.pattern.permute.xlu0 0
    %52 = vperm.xlu0 %51, %v34
    %v53 = vpop.permute.xlu0 %52
    %v55 = vperm.slane %v29, 0
    %v56 = vmul.f32 %v38, %v55
    %v57 = vmul.f32 %v43, %v55
    %v58 = vmul.f32 %v48, %v55
    %v59 = vmul.f32 %v53, %v55
    %60 = vset.pattern.permute.xlu0 1
    %61 = vperm.xlu0 %60, %v31
    %v62 = vpop.permute.xlu0 %61
    %64 = vset.pattern.permute.xlu0 1
    %65 = vperm.xlu0 %64, %v32
    %v66 = vpop.permute.xlu0 %65
    %68 = vset.pattern.permute.xlu0 1
    %69 = vperm.xlu0 %68, %v33
    %v70 = vpop.permute.xlu0 %69
    %72 = vset.pattern.permute.xlu0 1
    %73 = vperm.xlu0 %72, %v34
    %v74 = vpop.permute.xlu0 %73
    %v76 = vperm.slane %v30, 0
    %v77 = vmul.f32 %v62, %v76
    %v78 = vmul.f32 %v66, %v76
    %v79 = vmul.f32 %v70, %v76
    %v80 = vmul.f32 %v74, %v76
    %v81 = vadd.f32 %v56, %v77
    %v82 = vadd.f32 %v57, %v78
    %v83 = vadd.f32 %v58, %v79
    %v84 = vadd.f32 %v59, %v80
    %v85 = vld [vmem:[%s2] sm:$0xff]
    %v86 = vld [vmem:[%s2 + $0x8] sm:$0xff]
    %v87 = vld [vmem:[%s2 + $0x10] sm:$0xff]
    %v88 = vld [vmem:[%s2 + $0x18] sm:$0xff]
    %90 = vset.pattern.permute.xlu0 0
    %91 = vperm.xlu0 %90, %v85
    %v92 = vpop.permute.xlu0 %91
    %95 = vset.pattern.permute.xlu0 0
    %96 = vperm.xlu0 %95, %v86
    %v97 = vpop.permute.xlu0 %96
    %100 = vset.pattern.permute.xlu0 0
    %101 = vperm.xlu0 %100, %v87
    %v102 = vpop.permute.xlu0 %101
    %105 = vset.pattern.permute.xlu0 0
    %106 = vperm.xlu0 %105, %v88
    %v107 = vpop.permute.xlu0 %106
    %v109 = vadd.f32 %v81, %v92
    %v110 = vadd.f32 %v82, %v97
    %v111 = vadd.f32 %v83, %v102
    %v112 = vadd.f32 %v84, %v107
    %v113 = vmul.f32 %v109, 0.01
    %v114 = vmul.f32 %v110, 0.01
    %v115 = vmul.f32 %v111, 0.01
    %v116 = vmul.f32 %v112, 0.01
    %v117 = vmax.f32 %v109, %v113
    %v118 = vmax.f32 %v110, %v114
    %v119 = vmax.f32 %v111, %v115
    %v120 = vmax.f32 %v112, %v116
    %v121 = vld [vmem:[%s3] sm:$0xff]
    %v122 = vld [vmem:[%s3 + $0x8] sm:$0xff]
    %v123 = vld [vmem:[%s3 + $0x10] sm:$0xff]
    %v124 = vld [vmem:[%s3 + $0x18] sm:$0xff]
    %v125 = vld [vmem:[%s4] sm:$0xff]
    %v126 = vld [vmem:[%s4 + $0x8] sm:$0xff]
    %v127 = vld [vmem:[%s4 + $0x10] sm:$0xff]
    %v128 = vld [vmem:[%s4 + $0x18] sm:$0xff]
    %130 = vset.pattern.permute.xlu0 0
    %131 = vperm.xlu0 %130, %v125
    %v132 = vpop.permute.xlu0 %131
    %135 = vset.pattern.permute.xlu0 0
    %136 = vperm.xlu0 %135, %v126
    %v137 = vpop.permute.xlu0 %136
    %140 = vset.pattern.permute.xlu0 0
    %141 = vperm.xlu0 %140, %v127
    %v142 = vpop.permute.xlu0 %141
    %145 = vset.pattern.permute.xlu0 0
    %146 = vperm.xlu0 %145, %v128
    %v147 = vpop.permute.xlu0 %146
    %vm149 = vcmask 261120
    %v151 = vsel %vm149, %v121, 0
    %v154 = vsel %vm149, %v122, 0
    %v157 = vsel %vm149, %v123, 0
    %v160 = vsel %vm149, %v124, 0
    %162 = vmatpush.msra.mxu0 0.0
    %163 = vmatpush.msra.mxu0 0.0
    %164 = vmatpush.msra.mxu0 0.0
    %165 = vmatpush.msra.mxu0 0.0
    %166 = vmatpush.msra.mxu0 0.0
    %167 = vmatpush.msra.mxu0 0.0
    %168 = vmatpush.msra.mxu0 0.0
    %169 = vmatpush.msra.mxu0 0.0
    %170 = vmatpush.msra.mxu0 0.0
    %171 = vmatpush.msra.mxu0 0.0
    %172 = vmatpush.msra.mxu0 0.0
    %173 = vmatpush.msra.mxu0 0.0
    %174 = vmatpush.msra.mxu0 %v120
    %175 = vmatpush.msra.mxu0 %v119
    %176 = vmatpush.msra.mxu0 %v118
    %177 = vmatpush.msra.mxu0 %v117
    %178 = vmatmul.f32.gmra.mxu0 %v151
    %v179 = vpop.f32.mrf.mxu0
    %v180 = vadd.f32 %v132, %v179
    %181 = vmatmul.f32.gmra.mxu0 %v154
    %v182 = vpop.f32.mrf.mxu0
    %v183 = vadd.f32 %v137, %v182
    %184 = vmatmul.f32.gmra.mxu0 %v157
    %v185 = vpop.f32.mrf.mxu0
    %v186 = vadd.f32 %v142, %v185
    %187 = vmatmul.f32.gmra.mxu0 %v160
    %v188 = vpop.f32.mrf.mxu0
    %v189 = vadd.f32 %v147, %v188
    %190 = vdwg.mxu0
    %v191 = vmul.f32 %v180, 0.01
    %v192 = vmul.f32 %v183, 0.01
    %v193 = vmul.f32 %v186, 0.01
    %v194 = vmul.f32 %v189, 0.01
    %v195 = vmax.f32 %v180, %v191
    %v196 = vmax.f32 %v183, %v192
    %v197 = vmax.f32 %v186, %v193
    %v198 = vmax.f32 %v189, %v194
    %v199 = vld [vmem:[%s5] sm:$0xff]
    %v200 = vld [vmem:[%s5 + $0x8] sm:$0xff]
    %v201 = vld [vmem:[%s5 + $0x10] sm:$0xff]
    %v202 = vld [vmem:[%s5 + $0x18] sm:$0xff]
    %204 = vset.pattern.permute.xlu0 0
    %205 = vperm.xlu0 %204, %v199
    %v206 = vpop.permute.xlu0 %205
    %209 = vset.pattern.permute.xlu0 0
    %210 = vperm.xlu0 %209, %v200
    %v211 = vpop.permute.xlu0 %210
    %214 = vset.pattern.permute.xlu0 0
    %215 = vperm.xlu0 %214, %v201
    %v216 = vpop.permute.xlu0 %215
    %219 = vset.pattern.permute.xlu0 0
    %220 = vperm.xlu0 %219, %v202
    %v221 = vpop.permute.xlu0 %220
    %v223 = vmul.f32 %v206, %v195
    %v224 = vmul.f32 %v211, %v196
    %v225 = vmul.f32 %v216, %v197
    %v226 = vmul.f32 %v221, %v198
    %v227 = vadd.f32 %v223, %v224
    %v228 = vadd.f32 %v227, %v225
    %v229 = vadd.f32 %v228, %v226
    %v230 = vrot.slane %v229, 4
    %v231 = vadd.f32 %v229, %v230
    %v232 = vrot.slane %v231, 2
    %v233 = vadd.f32 %v231, %v232
    %v234 = vrot.slane %v233, 1
    %v235 = vadd.f32 %v233, %v234
    %v236 = vld [vmem:[#allocation2] sm:$0x1]
    %238 = vset.pattern.permute.xlu0 0
    %239 = vperm.xlu0 %238, %v236
    %v240 = vpop.permute.xlu0 %239
    %v242 = vperm.slane %v240, 0
    %v243 = vadd.f32 %v235, %v242
    %v244 = vxor.u32 %v243, 2147483648
    %v245 = vmul.f32 %v244, 1.442695
    %v246 = vpow.pop %v245
    %v247 = vadd.f32 %v246, 1.0
    %v248 = vrcp.pop %v247
    %v249 = vmul.f32 %v247, %v248
    %v250 = vsub.f32 1.0, %v249
    %v251 = vmul.f32 %v248, %v250
    %v252 = vadd.f32 %v248, %v251
    %vm253 = vweird.f32 %v247
    %vm254 = vweird.f32 %v248
    %vm255 = vmor %vm253, %vm254
    %v256 = vsel %vm255, %v248, %v252
    %v257 = vand.u32 2147483647, %v247
    %vm258 = vcmp.eq.f32.partialorder %v257, 8.507059e+37
    %v259 = vand.u32 %v247, 2147483648
    %v260 = vor.u32 1.1754944e-38, %v259
    %v261 = vsel %vm258, %v260, %v256
    %v262 = vmul.f32 1.0, %v261
    %263 = vst [vmem:[#allocation3] sm:$0x1] %v262
    // Predicated region
    $region30: #{tpu_custom_call.1} parent=1 // pred_check
      _
    $region31: #{tpu_custom_call.1} parent=1 // pred_check_branch
      %265 = sbr.rel (0) target = $region33
    $region32: #{tpu_custom_call.1} parent=1 // pred_region
      %267 = vsyncadd [#allocation4], 0
      %s269 = sshll.u32 [#allocation3], 4
      %s270 = int_to_ptr.vmem [resolvable:$true] %s269
      %s271 = sshll.u32 %s7, 4
      %s272 = int_to_ptr.hbm [resolvable:$true] %s271
      %274 = dma.vmem_to_hbm [thread:$0]  %s270, 16, %s272, [#allocation4]
    $region33: #{tpu_custom_call.1} parent=1 // pred_fallthru
      _
    // Predicated region
    $region34: #{tpu_custom_call.1} parent=1 // pred_check
      _
    $region35: #{tpu_custom_call.1} parent=1 // pred_check_branch
      %276 = sbr.rel (0) target = $region37
    $region36: #{tpu_custom_call.1} parent=1 // pred_region
      %278 = dma.done [#allocation4], 16
    $region37: #{tpu_custom_call.1} parent=1 // pred_fallthru
      _
    %279 = vsyncpa [#allocation4], 1

</llo_original>
